<compile_context>
chip_gen: v6e
topology: v6e:2x2x1
jax: 0.10.0
libtpu: 0.0.40
codegen_flags: <defaults>
</compile_context>

<pallas_src>
import functools

import jax
import jax.numpy as jnp
from jax.experimental import pallas as pl
from jax.experimental.pallas import tpu as pltpu


def _sa_kernel(qs_ref, ks_ref, v_ref, o_ref, *, has_pad):
    """One (batch-block, query-tile) step of grouped vector attention.

    qs_ref: (Bt, 1, TQ)  folded query scores  q_i = w_g . Q_i + b_g   (query window)
    ks_ref: (Bt, 1, Lp)  folded key scores    k_j = w_g . K_j         (all keys; pads = +inf)
    v_ref : (Bt, Lp, D)  value rows V = x @ Wv                        (all keys; pads = 0)
    o_ref : (Bt, TQ, D)  output rows
    """
    qs = qs_ref[:, 0, :].astype(jnp.float32)            # (Bt, TQ)
    ks = ks_ref[:, 0, :].astype(jnp.float32)            # (Bt, Lp)

    # Row max via the relu/min identity: max_j relu(q_i - k_j) == relu(q_i - min_j k_j).
    # Padded keys carry k_j = +inf so they never win the min.
    kmin = jnp.min(ks, axis=-1, keepdims=True)           # (Bt, 1)
    m = jnp.maximum(qs - kmin, 0.0)[:, :, None]          # (Bt, TQ, 1)

    # Fused score -> exp: exp argument <= 0 so e <= 1; `s` dies into `e`.
    s = qs[:, :, None] - ks[:, None, :]                  # (Bt, TQ, Lp); padded keys -> -inf
    e = jnp.exp(jnp.maximum(s, 0.0) - m)                 # (Bt, TQ, Lp)
    if has_pad:
        e = jnp.where((ks < jnp.inf)[:, None, :], e, 0.0)   # drop padded keys from softmax

    denom = jnp.sum(e, axis=-1, keepdims=True)            # (Bt, TQ, 1); always >= 1
    inv = pl.reciprocal(denom, approx=True)               # EUP slot
    inv = inv * (2.0 - denom * inv)                       # one Newton step -> f32 accurate

    # Unnormalized weights straight into the MXU; normalize the (TQ, D) result instead of
    # the (TQ, Lp) weights (D << Lp).
    out = jnp.einsum("bql,bld->bqd", e, v_ref[...],
                     preferred_element_type=jnp.float32)  # (Bt, TQ, D)

    # dropout(p=0.0) at eval is the identity.
    o_ref[...] = (out * inv).astype(o_ref.dtype)


def _round_up(n, m):
    return ((n + m - 1) // m) * m


def _choose_tiles(B, L, D):
    """Pick (Lp, tq, bb, vmem_limit_bytes) from a score-tile byte budget."""
    # Query tile: full (padded) sequence when small; 256 for moderate L; 128 for very long
    # sequences so the (TQ, Lp) f32 score tiles stay inside v7x's 64 MiB VMEM.
    if L <= 1024:
        Lp = _round_up(L, 8)
        tq = Lp
    elif L < 8192:
        tq = 256
        Lp = _round_up(L, tq)
    else:
        tq = 128
        Lp = _round_up(L, tq)

    d_lanes = _round_up(D, 128)                 # lane padding of (.., D) f32 tiles in VMEM
    per_b = (2 * tq * Lp * 4                    # live score temporaries (s, e)
             + 2 * Lp * d_lanes * 4             # V block, double-buffered
             + 2 * Lp * 4                       # ks block, double-buffered
             + 2 * max(tq, 128) * 4             # qs block, double-buffered
             + 2 * tq * d_lanes * 4             # output block, double-buffered
             + tq * d_lanes * 4)                # matmul result before the store
    budget = 20 * 1024 * 1024                   # safe on every generation (v7x 64 MiB VMEM)
    bb = max(1, min(B, budget // max(per_b, 1)))
    while B % bb:
        bb -= 1
    # Prefer >= 2 grid steps so both v7x TensorCores (and the software pipeline) get work.
    if bb > 1 and (B // bb) * (Lp // tq) < 2:
        bb = max(1, bb // 2)
        while B % bb:
            bb -= 1
    vmem_limit = int(min(48 * 1024 * 1024, max(32 * 1024 * 1024, int(1.4 * bb * per_b))))
    return Lp, tq, bb, vmem_limit


def sa_forward(x, wq, wk, wv, wg, bg):
    """Grouped vector attention (eval): softmax_j relu(w_g.(Q_i - K_j) + b_g) applied to V.

    x: (B, L, D); wq/wk/wv: (D, D) stored (in, out); wg: (D, 1); bg: (1, 1) or scalar.
    """
    B, L, D = x.shape
    f32 = jnp.float32
    xf = x.astype(f32)

    # Hoisted, q-invariant projections (plain XLA ops). Folding w_g into Wq/Wk is exact up
    # to ~1 ulp:  qs = x @ (Wq @ w_g) + b_g ,  ks = x @ (Wk @ w_g) ,  V = x @ Wv.
    qs = (xf @ (wq.astype(f32) @ wg.astype(f32)))[..., 0] + jnp.reshape(bg, ()).astype(f32)
    ks = (xf @ (wk.astype(f32) @ wg.astype(f32)))[..., 0]                      # (B, L)
    v = x @ wv                                                                 # (B, L, D)

    Lp, tq, bb, vmem_limit = _choose_tiles(B, L, D)
    has_pad = Lp != L
    if has_pad:
        pad = Lp - L
        qs = jnp.pad(qs, ((0, 0), (0, pad)))                                   # padded query rows trimmed below
        ks = jnp.pad(ks, ((0, 0), (0, pad)), constant_values=float("inf"))     # +inf -> masked out of softmax
        v = jnp.pad(v, ((0, 0), (0, pad), (0, 0)))

    # (B, 1, Lp) presentation keeps the last-two-dims tiling rules trivially satisfied.
    qs3 = qs[:, None, :]
    ks3 = ks[:, None, :]

    grid = (B // bb, Lp // tq)
    out = pl.pallas_call(
        functools.partial(_sa_kernel, has_pad=has_pad),
        out_shape=jax.ShapeDtypeStruct((B, Lp, D), x.dtype),
        grid=grid,
        in_specs=[
            pl.BlockSpec((bb, 1, tq), lambda b, q: (b, 0, q)),   # qs: query window
            pl.BlockSpec((bb, 1, Lp), lambda b, q: (b, 0, 0)),   # ks: all keys (q-invariant)
            pl.BlockSpec((bb, Lp, D), lambda b, q: (b, 0, 0)),   # V : all keys (q-invariant)
        ],
        out_specs=pl.BlockSpec((bb, tq, D), lambda b, q: (b, q, 0)),
        compiler_params=pltpu.CompilerParams(
            dimension_semantics=("parallel", "parallel"),
            vmem_limit_bytes=vmem_limit,
        ),
    )(qs3, ks3, v)

    if has_pad:
        out = out[:, :L, :]
    return out


if __name__ == "__main__":
    B, L, D = 2, 8, 32  # batch, seq, d_att
    key = jax.random.PRNGKey(0)
    k0, k1, k2, k3, k4, k5 = jax.random.split(key, 6)

    x = jax.random.normal(k0, (B, L, D), jnp.float32)
    wq = 0.1 * jax.random.normal(k1, (D, D), jnp.float32)
    wk = 0.1 * jax.random.normal(k2, (D, D), jnp.float32)
    wv = 0.1 * jax.random.normal(k3, (D, D), jnp.float32)
    wg = 0.1 * jax.random.normal(k4, (D, 1), jnp.float32)   # group_MLP Linear(D, 1) weight (transposed)
    bg = 0.1 * jax.random.normal(k5, (1, 1), jnp.float32)   # group_MLP Linear(D, 1) bias

    out = jax.block_until_ready(jax.jit(sa_forward)(x, wq, wk, wv, wg, bg))

    # Pure-JAX reference of the exact PyTorch semantics.
    Q = x @ wq
    K = x @ wk
    V = x @ wv
    score = jnp.maximum((Q @ wg) + bg[0, 0] - jnp.swapaxes(K @ wg, -1, -2), 0.0)  # (B, L, L)
    attn = jax.nn.softmax(score, axis=-1)
    ref = attn @ V

    assert out.shape == (B, L, D)
    assert jnp.allclose(out, ref, atol=1e-4, rtol=1e-4), "mismatch vs reference"
    print("KERNEL_OK")
</pallas_src>

<mosaic_0001>
module attributes {stable_mosaic.version = 11 : i64} {
  func.func @_sa_kernel(%arg0: i32, %arg1: i32, %arg2: memref<1x1x8xf32, #tpu.memory_space<vmem>>, %arg3: memref<1x1x8xf32, #tpu.memory_space<vmem>>, %arg4: memref<1x8x32xf32, #tpu.memory_space<vmem>>, %arg5: memref<1x8x32xf32, #tpu.memory_space<vmem>>) attributes {dimension_semantics = [#tpu.dimension_semantics<parallel>, #tpu.dimension_semantics<parallel>], iteration_bounds = array<i64: 2, 1>, scalar_prefetch = 0 : i64, scratch_operands = 0 : i64, tpu.core_type = #tpu.core_type<tc>, window_params = [{transform_indices = @transform_0, window_bounds = array<i64: 1, 1, 8>}, {transform_indices = @transform_1, window_bounds = array<i64: 1, 1, 8>}, {transform_indices = @transform_2, window_bounds = array<i64: 1, 8, 32>}, {transform_indices = @transform_3, window_bounds = array<i64: 1, 8, 32>}]} {
    %c0 = arith.constant 0 : index
    %c0_0 = arith.constant 0 : index
    %c0_1 = arith.constant 0 : index
    %0 = vector.load %arg2[%c0, %c0_0, %c0_1] : memref<1x1x8xf32, #tpu.memory_space<vmem>>, vector<1x1x8xf32>
    %1 = vector.shape_cast %0 : vector<1x1x8xf32> to vector<1x8xf32>
    %c0_2 = arith.constant 0 : index
    %c0_3 = arith.constant 0 : index
    %c0_4 = arith.constant 0 : index
    %2 = vector.load %arg3[%c0_2, %c0_3, %c0_4] : memref<1x1x8xf32, #tpu.memory_space<vmem>>, vector<1x1x8xf32>
    %3 = vector.shape_cast %2 : vector<1x1x8xf32> to vector<1x8xf32>
    %cst = arith.constant dense<0x7F800000> : vector<1xf32>
    %4 = vector.multi_reduction <minimumf>, %3, %cst [1] : vector<1x8xf32> to vector<1xf32>
    %5 = vector.shape_cast %4 : vector<1xf32> to vector<1x1xf32>
    %6 = vector.broadcast %5 : vector<1x1xf32> to vector<1x8xf32>
    %7 = arith.subf %1, %6 : vector<1x8xf32>
    %cst_5 = arith.constant 0.000000e+00 : f32
    %8 = vector.broadcast %cst_5 : f32 to vector<1x8xf32>
    %9 = arith.maximumf %7, %8 : vector<1x8xf32>
    %10 = vector.shape_cast %9 : vector<1x8xf32> to vector<1x8x1xf32>
    %11 = vector.shape_cast %1 : vector<1x8xf32> to vector<1x8x1xf32>
    %12 = vector.shape_cast %3 : vector<1x8xf32> to vector<1x1x8xf32>
    %13 = vector.broadcast %11 : vector<1x8x1xf32> to vector<1x8x8xf32>
    %14 = vector.broadcast %12 : vector<1x1x8xf32> to vector<1x8x8xf32>
    %15 = arith.subf %13, %14 : vector<1x8x8xf32>
    %cst_6 = arith.constant 0.000000e+00 : f32
    %16 = vector.broadcast %cst_6 : f32 to vector<1x8x8xf32>
    %17 = arith.maximumf %15, %16 : vector<1x8x8xf32>
    %18 = vector.broadcast %10 : vector<1x8x1xf32> to vector<1x8x8xf32>
    %19 = arith.subf %17, %18 : vector<1x8x8xf32>
    %20 = math.exp %19 : vector<1x8x8xf32>
    %cst_7 = arith.constant dense<0.000000e+00> : vector<1x8xf32>
    %21 = vector.multi_reduction <add>, %20, %cst_7 [2] : vector<1x8x8xf32> to vector<1x8xf32>
    %22 = vector.shape_cast %21 : vector<1x8xf32> to vector<1x8x1xf32>
    %23 = tpu.reciprocal %22 {approx = true} : vector<1x8x1xf32> -> vector<1x8x1xf32>
    %24 = arith.mulf %22, %23 : vector<1x8x1xf32>
    %cst_8 = arith.constant 2.000000e+00 : f32
    %25 = vector.broadcast %cst_8 : f32 to vector<1x8x1xf32>
    %26 = arith.subf %25, %24 : vector<1x8x1xf32>
    %27 = arith.mulf %23, %26 : vector<1x8x1xf32>
    %c0_9 = arith.constant 0 : index
    %c0_10 = arith.constant 0 : index
    %c0_11 = arith.constant 0 : index
    %28 = vector.load %arg4[%c0_9, %c0_10, %c0_11] : memref<1x8x32xf32, #tpu.memory_space<vmem>>, vector<1x8x32xf32>
    "tpu.trace_start"() <{level = 10 : i32, message = "bql,bld->bqd"}> : () -> ()
    %cst_12 = arith.constant dense<0.000000e+00> : vector<1x8x32xf32>
    %29 = tpu.matmul %20, %28, %cst_12 {dimension_numbers = #tpu.dot_dimension_numbers<[2], [1], [1], [2], [0, 0, 0, 1, 1, 2], [0], [0]>} : vector<1x8x8xf32>, vector<1x8x32xf32>, vector<1x8x32xf32> -> vector<1x8x32xf32>
    "tpu.trace_stop"() : () -> ()
    %30 = vector.broadcast %27 : vector<1x8x1xf32> to vector<1x8x32xf32>
    %31 = arith.mulf %29, %30 : vector<1x8x32xf32>
    %c0_13 = arith.constant 0 : index
    %c0_14 = arith.constant 0 : index
    %c0_15 = arith.constant 0 : index
    %32 = vector.load %arg5[%c0_13, %c0_14, %c0_15] : memref<1x8x32xf32, #tpu.memory_space<vmem>>, vector<1x8x32xf32>
    tpu.vector_store %arg5[%c0_13, %c0_14, %c0_15], %31 {strides = array<i32>} : memref<1x8x32xf32, #tpu.memory_space<vmem>>, vector<1x8x32xf32>,
    return
  }
  func.func @transform_0(%arg0: i32, %arg1: i32) -> (i32, i32, i32) {
    %c0_i32 = arith.constant 0 : i32
    %c0_i32_0 = arith.constant 0 : i32
    return %arg0, %c0_i32, %arg1 : i32, i32, i32
  }
  func.func @transform_1(%arg0: i32, %arg1: i32) -> (i32, i32, i32) {
    %c0_i32 = arith.constant 0 : i32
    %c0_i32_0 = arith.constant 0 : i32
    %c0_i32_1 = arith.constant 0 : i32
    return %arg0, %c0_i32, %c0_i32_0 : i32, i32, i32
  }
  func.func @transform_2(%arg0: i32, %arg1: i32) -> (i32, i32, i32) {
    %c0_i32 = arith.constant 0 : i32
    %c0_i32_0 = arith.constant 0 : i32
    %c0_i32_1 = arith.constant 0 : i32
    return %arg0, %c0_i32, %c0_i32_0 : i32, i32, i32
  }
  func.func @transform_3(%arg0: i32, %arg1: i32) -> (i32, i32, i32) {
    %c0_i32 = arith.constant 0 : i32
    %c0_i32_0 = arith.constant 0 : i32
    return %arg0, %arg1, %c0_i32 : i32, i32, i32
  }
}

</mosaic_0001>

<llo_original>
// kernel: sa_forward.1
$region0: #{sa_forward.1}
  #allocation0 [shape = 'u32[]', space=smem, size = 0x4, offset = 0x4, fixed_abs, tag = 'smem constant byte address 0x4 - core index']
  #allocation1 [shape = 'u32[144,128]{1,0:T(1,128)}', space=vmem, size = 0x12000, scoped, tag = 'internal scratch']
  %s0 = inlined_call_operand.vmem [shape: f32[2,1,8], index: 0, kind: input, shape index: {}]
  %s1 = inlined_call_operand.vmem [shape: f32[2,1,8], index: 1, kind: input, shape index: {}]
  %s2 = inlined_call_operand.vmem [shape: f32[2,8,32], index: 2, kind: input, shape index: {}]
  %s3 = inlined_call_operand.hbm [shape: f32[2,8,32], index: 3, kind: output, shape index: {}]
  %s4 = sld [smem:[#allocation0]]
  $region45: #{sa_forward.1} parent=0
    _
  %s6 = ssub.s32 1, %s4
  %s7 = scalar_select 0, %s6, %s4
  $region1: #{sa_forward.1} parent=0
    #allocation2 [shape = 'u8[8192]{0}', space=vmem, size = 0x2000, scoped, tag = 'output window, operand 0']
    #allocation3 [shape = 's32[2]{0}', space=sflag, size = 0x8, scoped, tag = 'scoped memory for sa_forward.1']
    %8 = vsyncpa [#allocation3], 0
    %s9 = scalar_lea.sflag [#allocation3], 1
    %10 = vsyncpa %s9, 0
    loop: start=0, step=1, limit=4
    $region2: #{sa_forward.1} parent=1 // loop_pre_header
      _
    $region3: #{sa_forward.1} parent=1 // loop_header
      %s12 = sphi 0, %s16
      %p13 = scmp.ge.s32.totalorder %s12, 4
      %s19 = sphi 0, %s31
      %s20 = sphi 0, %s27
      %s21 = sphi 0, %s19
      %s22 = sphi 0, %s20
      %s23 = sphi 0, %s21
      %s24 = sphi 0, %s22
      %s36 = sphi 0, %s38
      %s39 = sphi 0, %s36
      %s40 = sphi 0, %s39
      %s56 = sphi 0, %s40
      %s62 = sphi 0, %s64
      %s65 = sphi 0, %s62
      %s66 = sphi 0, %s65
      %s82 = sphi 0, %s66
      %s88 = sphi 0, %s90
      %s91 = sphi 0, %s88
      %s92 = sphi 0, %s91
      %s108 = sphi 0, %s92
      %s116 = sphi 0, %s118
      %s119 = sphi 0, %s116
      %s120 = sphi 0, %s119
      %s136 = sphi 0, %s120
    $region4: #{sa_forward.1} parent=1 // loop_header_branch
      %15 = sbr.rel (%p13) target = $region8
    $region5: #{sa_forward.1} parent=1 // loop_body
      %s17 = ssub.s32 %s12, 1
      %s18 = ssub.s32 %s12, 2
      %s25 = sadd.s32 1, %s20
      %p26 = scmp.ge.s32.totalorder %s25, 1
      %s27 = scalar_select %p26, 0, %s25
      %s28 = sadd.s32 1, %s19
      %s29 = scalar_select %p26, %s28, %s19
      %p30 = scmp.ge.s32.totalorder %s29, 2
      %s31 = scalar_select %p30, 0, %s29
      %s32 = ssub.s32 %s19, %s31
      %s33 = ssub.s32 %s20, %s27
      %s34 = sor.u32 %s32, %s33
      %p35 = scmp.eq.s32.totalorder %s34, 0
      %s37 = sadd.s32 %s36, 1
      %s38 = scalar_select %p35, %s36, %s37
      %p41 = pneg %p35
      %p42 = scmp.eq.s32.totalorder %s12, 1
      %p43 = por %p41, %p42
      %p44 = scmp.ne.s32.totalorder %s36, %s39
      %p45 = scmp.eq.s32.totalorder %s12, 0
      %p46 = por %p44, %p45
      %p47 = scmp.ne.s32.totalorder %s36, %s39
      %p48 = scmp.eq.s32.totalorder %s17, 1
      %p49 = por %p47, %p48
      %p50 = scmp.ne.s32.totalorder %s39, %s40
      %p51 = scmp.eq.s32.totalorder %s17, 0
      %p52 = por %p50, %p51
      %p53 = scmp.ne.s32.totalorder %s39, %s40
      %p54 = scmp.eq.s32.totalorder %s18, 1
      %p55 = por %p53, %p54
      %p57 = scmp.ne.s32.totalorder %s40, %s56
      %p58 = scmp.eq.s32.totalorder %s18, 0
      %p59 = por %p57, %p58
      %s60 = ssub.s32 %s19, %s31
      %p61 = scmp.eq.s32.totalorder %s60, 0
      %s63 = sadd.s32 %s62, 1
      %s64 = scalar_select %p61, %s62, %s63
      %p67 = pneg %p61
      %p68 = scmp.eq.s32.totalorder %s12, 1
      %p69 = por %p67, %p68
      %p70 = scmp.ne.s32.totalorder %s62, %s65
      %p71 = scmp.eq.s32.totalorder %s12, 0
      %p72 = por %p70, %p71
      %p73 = scmp.ne.s32.totalorder %s62, %s65
      %p74 = scmp.eq.s32.totalorder %s17, 1
      %p75 = por %p73, %p74
      %p76 = scmp.ne.s32.totalorder %s65, %s66
      %p77 = scmp.eq.s32.totalorder %s17, 0
      %p78 = por %p76, %p77
      %p79 = scmp.ne.s32.totalorder %s65, %s66
      %p80 = scmp.eq.s32.totalorder %s18, 1
      %p81 = por %p79, %p80
      %p83 = scmp.ne.s32.totalorder %s66, %s82
      %p84 = scmp.eq.s32.totalorder %s18, 0
      %p85 = por %p83, %p84
      %s86 = ssub.s32 %s19, %s31
      %p87 = scmp.eq.s32.totalorder %s86, 0
      %s89 = sadd.s32 %s88, 1
      %s90 = scalar_select %p87, %s88, %s89
      %p93 = pneg %p87
      %p94 = scmp.eq.s32.totalorder %s12, 1
      %p95 = por %p93, %p94
      %p96 = scmp.ne.s32.totalorder %s88, %s91
      %p97 = scmp.eq.s32.totalorder %s12, 0
      %p98 = por %p96, %p97
      %p99 = scmp.ne.s32.totalorder %s88, %s91
      %p100 = scmp.eq.s32.totalorder %s17, 1
      %p101 = por %p99, %p100
      %p102 = scmp.ne.s32.totalorder %s91, %s92
      %p103 = scmp.eq.s32.totalorder %s17, 0
      %p104 = por %p102, %p103
      %p105 = scmp.ne.s32.totalorder %s91, %s92
      %p106 = scmp.eq.s32.totalorder %s18, 1
      %p107 = por %p105, %p106
      %p109 = scmp.ne.s32.totalorder %s92, %s108
      %p110 = scmp.eq.s32.totalorder %s18, 0
      %p111 = por %p109, %p110
      %s112 = ssub.s32 %s19, %s31
      %s113 = ssub.s32 %s20, %s27
      %s114 = sor.u32 %s112, %s113
      %p115 = scmp.eq.s32.totalorder %s114, 0
      %s117 = sadd.s32 %s116, 1
      %s118 = scalar_select %p115, %s116, %s117
      %p121 = pneg %p115
      %p122 = scmp.eq.s32.totalorder %s12, 1
      %p123 = por %p121, %p122
      %p124 = scmp.ne.s32.totalorder %s116, %s119
      %p125 = scmp.eq.s32.totalorder %s12, 0
      %p126 = por %p124, %p125
      %p127 = scmp.ne.s32.totalorder %s116, %s119
      %p128 = scmp.eq.s32.totalorder %s17, 1
      %p129 = por %p127, %p128
      %p130 = scmp.ne.s32.totalorder %s119, %s120
      %p131 = scmp.eq.s32.totalorder %s17, 0
      %p132 = por %p130, %p131
      %p133 = scmp.ne.s32.totalorder %s119, %s120
      %p134 = scmp.eq.s32.totalorder %s18, 1
      %p135 = por %p133, %p134
      %p137 = scmp.ne.s32.totalorder %s120, %s136
      %p138 = scmp.eq.s32.totalorder %s18, 0
      %p139 = por %p137, %p138
      %p140 = scmp.le.s32.totalorder 1, %s12
      %p141 = scmp.lt.s32.totalorder %s12, 3
      %p142 = pnand %p140, %p141
      %p143 = pneg %p142
      // Predicated region
      $region9: #{sa_forward.1} parent=5 // pred_check
        _
      $region10: #{sa_forward.1} parent=5 // pred_check_branch
        %145 = sbr.rel (%p142) target = $region12
      $region11: #{sa_forward.1} parent=5 // pred_region
        %s146 = ssub.s32 %s12, 1
      $region12: #{sa_forward.1} parent=5 // pred_fallthru
        _
      %p147 = scmp.lt.s32.totalorder %s12, 2
      // Predicated region
      $region13: #{sa_forward.1} parent=5 // pred_check
        %p148 = pneg %p147
      $region14: #{sa_forward.1} parent=5 // pred_check_branch
        %150 = sbr.rel (%p148) target = $region16
      $region15: #{sa_forward.1} parent=5 // pred_region
        // Predicated region
        $region17: #{sa_forward.1} parent=15 // pred_check
          %p151 = pneg %p46
        $region18: #{sa_forward.1} parent=15 // pred_check_branch
          %153 = sbr.rel (%p151) target = $region20
        $region19: #{sa_forward.1} parent=15 // pred_region
          %p154 = scmp.lt.s32.totalorder %s19, 1
          %s155 = scalar_select %p154, %s19, 1
          %p156 = scmp.lt.s32.totalorder %s20, 0
          %s157 = scalar_select %p156, %s20, 0
          %s158 = sadd.s32 %s157, %s155
          %s159 = scalar_lea.vmem %s0, %s158
        $region20: #{sa_forward.1} parent=15 // pred_fallthru
          _
        // Predicated region
        $region21: #{sa_forward.1} parent=15 // pred_check
          %p160 = pneg %p72
        $region22: #{sa_forward.1} parent=15 // pred_check_branch
          %162 = sbr.rel (%p160) target = $region24
        $region23: #{sa_forward.1} parent=15 // pred_region
          %p163 = scmp.lt.s32.totalorder %s19, 1
          %s164 = scalar_select %p163, %s19, 1
          %s165 = scalar_lea.vmem %s1, %s164
        $region24: #{sa_forward.1} parent=15 // pred_fallthru
          _
        // Predicated region
        $region25: #{sa_forward.1} parent=15 // pred_check
          %p166 = pneg %p98
        $region26: #{sa_forward.1} parent=15 // pred_check_branch
          %168 = sbr.rel (%p166) target = $region28
        $region27: #{sa_forward.1} parent=15 // pred_region
          %p169 = scmp.lt.s32.totalorder %s19, 1
          %s170 = scalar_select %p169, %s19, 1
          %s171 = smul.addr %s170, 8
          %s172 = scalar_lea.vmem %s2, %s171
        $region28: #{sa_forward.1} parent=15 // pred_fallthru
          _
      $region16: #{sa_forward.1} parent=5 // pred_fallthru
        _
      %p173 = scmp.le.s32.totalorder 1, %s12
      %p174 = scmp.lt.s32.totalorder %s12, 3
      %p175 = pnand %p173, %p174
      %p176 = pneg %p175
      // Predicated region
      $region29: #{sa_forward.1} parent=5 // pred_check
        _
      $region30: #{sa_forward.1} parent=5 // pred_check_branch
        %178 = sbr.rel (%p175) target = $region32
      $region31: #{sa_forward.1} parent=5 // pred_region
        %s179 = ssub.s32 %s12, 1
        %p180 = scmp.lt.s32.totalorder %s21, 1
        %s181 = scalar_select %p180, %s21, 1
        %p182 = scmp.lt.s32.totalorder %s22, 0
        %s183 = scalar_select %p182, %s22, 0
        %s184 = sadd.s32 %s183, %s181
        %s185 = scalar_lea.vmem %s0, %s184
        %p186 = pneg %p52
        %p187 = pneg %p49
        %p188 = scmp.lt.s32.totalorder %s21, 1
        %s189 = scalar_select %p188, %s21, 1
        %s190 = scalar_lea.vmem %s1, %s189
        %p191 = pneg %p78
        %p192 = pneg %p75
        %p193 = scmp.lt.s32.totalorder %s21, 1
        %s194 = scalar_select %p193, %s21, 1
        %s195 = smul.addr %s194, 8
        %s196 = scalar_lea.vmem %s2, %s195
        %p197 = pneg %p104
        %p198 = pneg %p101
        %p199 = pneg %p132
        %p200 = pneg %p129
        %s201 = sand.u32 %s119, 1
        %s202 = scalar_lea.sflag [#allocation3], %s201
        %s203 = sand.u32 %s119, 1
        %s204 = smul.addr %s203, 8
        %s205 = scalar_lea.vmem [#allocation2], %s204
        %p206 = scmp.lt.s32.totalorder %s21, 1
        %s207 = scalar_select %p206, %s21, 1
        %p208 = scmp.lt.s32.totalorder %s22, 0
        %s209 = scalar_select %p208, %s22, 0
        %s210 = sadd.s32 %s209, %s207
        %s211 = scalar_lea.vmem %s0, %s210
        %p212 = scmp.lt.s32.totalorder %s21, 1
        %s213 = scalar_select %p212, %s21, 1
        %s214 = scalar_lea.vmem %s1, %s213
        %p215 = scmp.lt.s32.totalorder %s21, 1
        %s216 = scalar_select %p215, %s21, 1
        %s217 = smul.addr %s216, 8
        %s218 = scalar_lea.vmem %s2, %s217
        %v219 = vld [vmem:[%s211] sm:$0x1]
        %v220 = vld [vmem:[%s214] sm:$0x1]
        %vm221 = vcmask 57344
        %v222 = vsel %vm221, %v220, inf
        %223 = vmin.xlane.f32.xlu0 %v222
        %v224 = vpop.xlane.xlu0 %223
        %v225 = vsub.f32 %v219, %v224
        %v226 = vmax.f32 %v225, 0.0
        %v227 = vlaneseq
        %v228 = vshrl.u32 %v227, 7
        %v229 = vsub.s32 0, %v228
        %v230 = vrot.slane %v226, %v229
        %232 = vbcast.lane.b32.xlu0 %v230, 256
        %v233 = vpop.permute.xlu0 %232
        %v234 = vlaneseq
        %v235 = vshrl.u32 %v234, 7
        %v236 = vsub.s32 0, %v235
        %v237 = vrot.slane %v219, %v236
        %239 = vbcast.lane.b32.xlu0 %v237, 256
        %v240 = vpop.permute.xlu0 %239
        %v242 = vlaneseq
        %v243 = vshrl.u32 %v242, 7
        %v244 = vsub.s32 0, %v243
        %v245 = vrot.slane %v220, %v244
        %v247 = vsub.f32 %v240, %v245
        %v248 = vmax.f32 %v247, 0.0
        %v249 = vsub.f32 %v248, %v233
        %v250 = vmul.f32 %v249, 1.442695
        %v251 = vpow.pop %v250
        %vm252 = vcmask 64512
        %v253 = vsel %vm252, %v251, 0.0
        %254 = vadd.xlane.f32.xlu0 %v253
        %v255 = vpop.xlane.xlu0 %254
        %v256 = vrcp.pop %v255
        %v257 = vmul.f32 %v255, %v256
        %v258 = vsub.f32 2.0, %v257
        %v259 = vmul.f32 %v256, %v258
        %v260 = vld [vmem:[%s218] sm:$0xff]
        %v262 = vsel %vm252, %v251, 0
        %264 = vmatprep.subr.mxu0 0.0
        %265 = vmatpush1.msra.mxu0 0.0
        %266 = vmatprep.subr.mxu0 0.0
        %267 = vmatpush1.msra.mxu0 0.0
        %268 = vmatprep.subr.mxu0 0.0
        %269 = vmatpush1.msra.mxu0 0.0
        %270 = vmatprep.subr.mxu0 0.0
        %271 = vmatpush1.msra.mxu0 0.0
        %272 = vmatprep.subr.mxu0 0.0
        %273 = vmatpush1.msra.mxu0 0.0
        %274 = vmatprep.subr.mxu0 0.0
        %275 = vmatpush1.msra.mxu0 0.0
        %276 = vmatprep.subr.mxu0 0.0
        %277 = vmatpush1.msra.mxu0 0.0
        %278 = vmatprep.subr.mxu0 0.0
        %279 = vmatpush1.msra.mxu0 0.0
        %280 = vmatprep.subr.mxu0 0.0
        %281 = vmatpush1.msra.mxu0 0.0
        %282 = vmatprep.subr.mxu0 0.0
        %283 = vmatpush1.msra.mxu0 0.0
        %284 = vmatprep.subr.mxu0 0.0
        %285 = vmatpush1.msra.mxu0 0.0
        %286 = vmatprep.subr.mxu0 0.0
        %287 = vmatpush1.msra.mxu0 0.0
        %288 = vmatprep.subr.mxu0 0.0
        %289 = vmatpush1.msra.mxu0 0.0
        %290 = vmatprep.subr.mxu0 0.0
        %291 = vmatpush1.msra.mxu0 0.0
        %292 = vmatprep.subr.mxu0 0.0
        %293 = vmatpush1.msra.mxu0 0.0
        %294 = vmatprep.subr.mxu0 0.0
        %295 = vmatpush1.msra.mxu0 %v260
        %296 = vmatprep.subr.mxu0 0.0
        %297 = vmatpush2.msra.mxu0 0.0
        %298 = vmatprep.subr.mxu0 0.0
        %299 = vmatpush2.msra.mxu0 0.0
        %300 = vmatprep.subr.mxu0 0.0
        %301 = vmatpush2.msra.mxu0 0.0
        %302 = vmatprep.subr.mxu0 0.0
        %303 = vmatpush2.msra.mxu0 0.0
        %304 = vmatprep.subr.mxu0 0.0
        %305 = vmatpush2.msra.mxu0 0.0
        %306 = vmatprep.subr.mxu0 0.0
        %307 = vmatpush2.msra.mxu0 0.0
        %308 = vmatprep.subr.mxu0 0.0
        %309 = vmatpush2.msra.mxu0 0.0
        %310 = vmatprep.subr.mxu0 0.0
        %311 = vmatpush2.msra.mxu0 0.0
        %312 = vmatprep.subr.mxu0 0.0
        %313 = vmatpush2.msra.mxu0 0.0
        %314 = vmatprep.subr.mxu0 0.0
        %315 = vmatpush2.msra.mxu0 0.0
        %316 = vmatprep.subr.mxu0 0.0
        %317 = vmatpush2.msra.mxu0 0.0
        %318 = vmatprep.subr.mxu0 0.0
        %319 = vmatpush2.msra.mxu0 0.0
        %320 = vmatprep.subr.mxu0 0.0
        %321 = vmatpush2.msra.mxu0 0.0
        %322 = vmatprep.subr.mxu0 0.0
        %323 = vmatpush2.msra.mxu0 0.0
        %324 = vmatprep.subr.mxu0 0.0
        %325 = vmatpush2.msra.mxu0 0.0
        %326 = vmatprep.subr.mxu0 0.0
        %327 = vmatpush2.msra.mxu0 0.0
        %328 = vmatprep.mubr.f32.mxu0 0.0
        %329 = vmatmul.mubr.f32.gmra.mxu0 %v262
        %v330 = vpop.f32.mrf.mxu0
        %v331 = vadd.f32 0.0, %v330
        %v332 = vpop.f32.mrf.mxu0
        %333 = vdwg.mxu0
        %v334 = vmul.f32 %v331, %v259
        %vm335 = vcmask 261120
        %336 = vst.msk [vmem:[%s205] sm:$0xff] %vm335, %v334
        %s337 = sand.u32 %s119, 1
        %s338 = scalar_lea.sflag [#allocation3], %s337
        %s339 = sand.u32 %s119, 1
        %s340 = smul.addr %s339, 8
        %s341 = scalar_lea.vmem [#allocation2], %s340
        // Predicated region
        $region33: #{sa_forward.1} parent=31 // pred_check
          %p342 = pneg %p129
        $region34: #{sa_forward.1} parent=31 // pred_check_branch
          %344 = sbr.rel (%p342) target = $region36
        $region35: #{sa_forward.1} parent=31 // pred_region
          %s346 = ssub.s32 128, 128
          %347 = vsyncadd %s338, %s346
          %s348 = sadd.s32 %s22, %s21
          %s349 = smul.addr %s348, 128
          %s350 = scalar_lea.hbm %s3, %s349
          %s352 = sshll.u32 %s341, 4
          %s353 = int_to_ptr.vmem [resolvable:$true] %s352
          %355 = dma.vmem_to_hbm [thread:$0]  %s353, 128, %s350, %s338
        $region36: #{sa_forward.1} parent=31 // pred_fallthru
          _
      $region32: #{sa_forward.1} parent=5 // pred_fallthru
        _
      %p356 = scmp.le.s32.totalorder 2, %s12
      // Predicated region
      $region37: #{sa_forward.1} parent=5 // pred_check
        %p357 = pneg %p356
      $region38: #{sa_forward.1} parent=5 // pred_check_branch
        %359 = sbr.rel (%p357) target = $region40
      $region39: #{sa_forward.1} parent=5 // pred_region
        %s360 = ssub.s32 %s12, 2
        // Predicated region
        $region41: #{sa_forward.1} parent=39 // pred_check
          %p361 = pneg %p135
        $region42: #{sa_forward.1} parent=39 // pred_check_branch
          %363 = sbr.rel (%p361) target = $region44
        $region43: #{sa_forward.1} parent=39 // pred_region
          %s364 = sand.u32 %s120, 1
          %s365 = scalar_lea.sflag [#allocation3], %s364
          %s366 = sand.u32 %s120, 1
          %s367 = smul.addr %s366, 8
          %s368 = scalar_lea.vmem [#allocation2], %s367
          %369 = dma.done %s365, 128
        $region44: #{sa_forward.1} parent=39 // pred_fallthru
          _
      $region40: #{sa_forward.1} parent=5 // pred_fallthru
        _
    $region6: #{sa_forward.1} parent=1 // loop_footer
      %s16 = sadd.s32 1, %s12
    $region7: #{sa_forward.1} parent=1 // loop_footer_branch
      %11 = sbr.rel target = $region3
    $region8: #{sa_forward.1} parent=1 // loop_exit
      _
    %370 = vsyncpa [#allocation3], 1
    %s371 = scalar_lea.sflag [#allocation3], 1
    %372 = vsyncpa %s371, 1

</llo_original>
